<compile_context>
chip_gen: v7x
topology: tpu7x:2x2x1
jax: 0.10.0
libtpu: 0.0.40
codegen_flags: <defaults>
</compile_context>

<pallas_src>
import functools

import jax
import jax.numpy as jnp
from jax.experimental import pallas as pl
from jax.experimental.pallas import tpu as pltpu


# ----------------------------- helpers ------------------------------------

def _round_up(x, m):
    return (x + m - 1) // m * m


def _pick_tile_m(m, preferred=256):
    # Row tile: multiple of 8, no larger than needed, capped at `preferred`
    # so VMEM usage stays generation-independent (v7x has only 64 MiB / TC).
    return min(preferred, _round_up(m, 8))


# ----------------------------- Pallas kernels ------------------------------

def _ln_qkv_kernel(x_ref, g_ref, b_ref, w_ref, o_ref, *, eps):
    """LayerNorm over the last dim, then x_norm @ W_qkv (bf16 MXU, f32 acc)."""
    x = x_ref[...]                                       # (TM, D) f32
    mean = jnp.mean(x, axis=-1, keepdims=True)
    xc = x - mean
    var = jnp.mean(xc * xc, axis=-1, keepdims=True)      # centered -> no E[x^2]-m^2 cancellation
    xn = xc * jax.lax.rsqrt(var + eps)
    xn = xn * g_ref[...] + b_ref[...]
    o_ref[...] = jnp.dot(xn.astype(jnp.bfloat16), w_ref[...],
                         preferred_element_type=jnp.float32)


def _attn_kernel(q_ref, k_ref, v_ref, o_ref, *, scale, n_real):
    """Full attention for one (batch, head): softmax(q k^T * scale) v."""
    q = q_ref[...]                                       # (Np, dh) bf16
    k = k_ref[...]
    v = v_ref[...]
    s = jax.lax.dot_general(q, k, (((1,), (1,)), ((), ())),
                            preferred_element_type=jnp.float32) * scale
    if n_real < s.shape[-1]:                             # mask padded key columns
        col = jax.lax.broadcasted_iota(jnp.int32, s.shape, 1)
        s = jnp.where(col < n_real, s, -1e30)
    m = jnp.max(s, axis=-1, keepdims=True)
    p = jnp.exp(s - m)
    l = jnp.sum(p, axis=-1, keepdims=True)
    p = p * pl.reciprocal(l, approx=True)                # EUP slot, f32
    o_ref[...] = jnp.dot(p.astype(jnp.bfloat16), v,
                         preferred_element_type=jnp.float32)


def _proj_kernel(x_ref, w_ref, o_ref):
    o_ref[...] = jnp.dot(x_ref[...], w_ref[...],
                         preferred_element_type=jnp.float32)


# ----------------------------- kernel wrappers ------------------------------

def ln_qkv(x2d, gamma, beta, w_qkv, *, eps=1e-5):
    """x2d: (M, D) f32 -> (M, 3*inner) f32, fused LayerNorm + Linear(no bias)."""
    m, d = x2d.shape
    kout = w_qkv.shape[1]
    tm = _pick_tile_m(m)
    mp = _round_up(m, tm)
    if mp != m:
        x2d = jnp.pad(x2d, ((0, mp - m), (0, 0)))        # pad rows only (cheap)
    g2 = gamma.reshape(1, d).astype(jnp.float32)
    b2 = beta.reshape(1, d).astype(jnp.float32)
    wb = w_qkv.astype(jnp.bfloat16)

    out = pl.pallas_call(
        functools.partial(_ln_qkv_kernel, eps=eps),
        out_shape=jax.ShapeDtypeStruct((mp, kout), jnp.float32),
        grid=(mp // tm,),
        in_specs=[pl.BlockSpec((tm, d), lambda i: (i, 0)),
                  pl.BlockSpec((1, d), lambda i: (0, 0)),
                  pl.BlockSpec((1, d), lambda i: (0, 0)),
                  pl.BlockSpec((d, kout), lambda i: (0, 0))],
        out_specs=pl.BlockSpec((tm, kout), lambda i: (i, 0)),
        compiler_params=pltpu.CompilerParams(
            dimension_semantics=("parallel",)),
    )(x2d, g2, b2, wb)
    return out[:m]


def attention_core(q, k, v, *, scale, n_real):
    """q/k/v: (B*H, Np, dh) bf16 -> (B*H, Np, dh) f32."""
    bh, npad, dh = q.shape
    out = pl.pallas_call(
        functools.partial(_attn_kernel, scale=scale, n_real=n_real),
        out_shape=jax.ShapeDtypeStruct((bh, npad, dh), jnp.float32),
        grid=(bh,),
        in_specs=[pl.BlockSpec((None, npad, dh), lambda i: (i, 0, 0)),
                  pl.BlockSpec((None, npad, dh), lambda i: (i, 0, 0)),
                  pl.BlockSpec((None, npad, dh), lambda i: (i, 0, 0))],
        out_specs=pl.BlockSpec((None, npad, dh), lambda i: (i, 0, 0)),
        compiler_params=pltpu.CompilerParams(
            dimension_semantics=("parallel",)),
    )(q, k, v)
    return out


def proj(x2d, w):
    """x2d: (M, inner) -> (M, D) f32, Linear(no bias)."""
    m, kin = x2d.shape
    dout = w.shape[1]
    tm = _pick_tile_m(m)
    mp = _round_up(m, tm)
    xb = x2d.astype(jnp.bfloat16)
    if mp != m:
        xb = jnp.pad(xb, ((0, mp - m), (0, 0)))
    out = pl.pallas_call(
        _proj_kernel,
        out_shape=jax.ShapeDtypeStruct((mp, dout), jnp.float32),
        grid=(mp // tm,),
        in_specs=[pl.BlockSpec((tm, kin), lambda i: (i, 0)),
                  pl.BlockSpec((kin, dout), lambda i: (0, 0))],
        out_specs=pl.BlockSpec((tm, dout), lambda i: (i, 0)),
        compiler_params=pltpu.CompilerParams(
            dimension_semantics=("parallel",)),
    )(xb, w.astype(jnp.bfloat16))
    return out[:m]


# ----------------------------- model ---------------------------------------

def init_params(key, dim, heads=8, dim_head=64):
    inner = heads * dim_head
    k1, k2 = jax.random.split(key)
    return {
        'ln_g': jnp.ones((dim,), jnp.float32),
        'ln_b': jnp.zeros((dim,), jnp.float32),
        # torch Linear weight is (out, in); we store the (in, out) transpose.
        'w_qkv': jax.random.normal(k1, (dim, 3 * inner), jnp.float32) * dim ** -0.5,
        'w_out': jax.random.normal(k2, (inner, dim), jnp.float32) * inner ** -0.5,
    }


def attention_forward(x, params, *, heads, dim_head):
    """x: (B, N, dim) f32 -> (B, N, dim) f32 (matches Attention.forward)."""
    b, n, d = x.shape
    inner = heads * dim_head
    scale = dim_head ** (-0.5)

    # 1) LayerNorm + to_qkv fused kernel.
    x2d = x.reshape(b * n, d).astype(jnp.float32)
    qkv = ln_qkv(x2d, params['ln_g'], params['ln_b'], params['w_qkv'])  # (B*N, 3*inner)

    # 2) chunk(3) + rearrange 'b n (h d) -> b h n d'  (layout glue).
    qkv = qkv.reshape(b, n, 3, heads, dim_head).transpose(2, 0, 3, 1, 4)  # (3,B,H,N,dh)
    q, k, v = qkv[0], qkv[1], qkv[2]

    n_pad = _round_up(n, 8)
    if n_pad != n:
        pad = ((0, 0), (0, 0), (0, n_pad - n), (0, 0))
        q, k, v = jnp.pad(q, pad), jnp.pad(k, pad), jnp.pad(v, pad)

    q = q.reshape(b * heads, n_pad, dim_head).astype(jnp.bfloat16)
    k = k.reshape(b * heads, n_pad, dim_head).astype(jnp.bfloat16)
    v = v.reshape(b * heads, n_pad, dim_head).astype(jnp.bfloat16)

    # 3) softmax attention kernel, one grid step per (batch, head).
    o = attention_core(q, k, v, scale=scale, n_real=n)       # (B*H, Np, dh) f32

    # 4) rearrange 'b h n d -> b n (h d)' and to_out projection.
    o = o.reshape(b, heads, n_pad, dim_head)[:, :, :n, :]
    o = o.transpose(0, 2, 1, 3).reshape(b * n, inner)
    out = proj(o, params['w_out'])                           # (B*N, dim)
    return out.reshape(b, n, d)


# ----------------------------- main -----------------------------------------

if __name__ == "__main__":
    key = jax.random.PRNGKey(0)
    pkey, xkey = jax.random.split(key)

    B, N, DIM, HEADS, DIM_HEAD = 2, 8, 32, 8, 64   # module defaults: heads=8, dim_head=64
    params = init_params(pkey, DIM, heads=HEADS, dim_head=DIM_HEAD)
    x = jax.random.normal(xkey, (B, N, DIM), jnp.float32)

    out = attention_forward(x, params, heads=HEADS, dim_head=DIM_HEAD)
    jax.block_until_ready(out)
    assert out.shape == (B, N, DIM), out.shape
    assert bool(jnp.all(jnp.isfinite(out)))
    print("KERNEL_OK")
</pallas_src>

<mosaic_0001>
module attributes {stable_mosaic.version = 11 : i64} {
  func.func @_ln_qkv_kernel(%arg0: i32, %arg1: memref<16x32xf32, #tpu.memory_space<vmem>>, %arg2: memref<1x32xf32, #tpu.memory_space<vmem>>, %arg3: memref<1x32xf32, #tpu.memory_space<vmem>>, %arg4: memref<32x1536xbf16, #tpu.memory_space<vmem>>, %arg5: memref<16x1536xf32, #tpu.memory_space<vmem>>) attributes {dimension_semantics = [#tpu.dimension_semantics<parallel>], iteration_bounds = array<i64: 1>, scalar_prefetch = 0 : i64, scratch_operands = 0 : i64, tpu.core_type = #tpu.core_type<tc>, window_params = [{transform_indices = @transform_0, window_bounds = array<i64: 16, 32>}, {pipeline_mode = #tpu.pipeline_mode<synchronous>, transform_indices = @transform_1, window_bounds = array<i64: 1, 32>}, {pipeline_mode = #tpu.pipeline_mode<synchronous>, transform_indices = @transform_2, window_bounds = array<i64: 1, 32>}, {pipeline_mode = #tpu.pipeline_mode<synchronous>, transform_indices = @transform_3, window_bounds = array<i64: 32, 1536>}, {transform_indices = @transform_4, window_bounds = array<i64: 16, 1536>}]} {
    %c0 = arith.constant 0 : index
    %c0_0 = arith.constant 0 : index
    %0 = vector.load %arg1[%c0, %c0_0] : memref<16x32xf32, #tpu.memory_space<vmem>>, vector<16x32xf32>
    %cst = arith.constant dense<0.000000e+00> : vector<16xf32>
    %1 = vector.multi_reduction <add>, %0, %cst [1] : vector<16x32xf32> to vector<16xf32>
    %2 = vector.shape_cast %1 : vector<16xf32> to vector<16x1xf32>
    %cst_1 = arith.constant 3.200000e+01 : f32
    %3 = vector.broadcast %cst_1 : f32 to vector<16x1xf32>
    %4 = arith.divf %2, %3 : vector<16x1xf32>
    %5 = vector.broadcast %4 : vector<16x1xf32> to vector<16x32xf32>
    %6 = arith.subf %0, %5 : vector<16x32xf32>
    %7 = arith.mulf %6, %6 : vector<16x32xf32>
    %cst_2 = arith.constant dense<0.000000e+00> : vector<16xf32>
    %8 = vector.multi_reduction <add>, %7, %cst_2 [1] : vector<16x32xf32> to vector<16xf32>
    %9 = vector.shape_cast %8 : vector<16xf32> to vector<16x1xf32>
    %cst_3 = arith.constant 3.200000e+01 : f32
    %10 = vector.broadcast %cst_3 : f32 to vector<16x1xf32>
    %11 = arith.divf %9, %10 : vector<16x1xf32>
    %cst_4 = arith.constant 9.99999974E-6 : f32
    %12 = vector.broadcast %cst_4 : f32 to vector<16x1xf32>
    %13 = arith.addf %11, %12 : vector<16x1xf32>
    %14 = math.rsqrt %13 : vector<16x1xf32>
    %15 = vector.broadcast %14 : vector<16x1xf32> to vector<16x32xf32>
    %16 = arith.mulf %6, %15 : vector<16x32xf32>
    %c0_5 = arith.constant 0 : index
    %c0_6 = arith.constant 0 : index
    %17 = vector.load %arg2[%c0_5, %c0_6] : memref<1x32xf32, #tpu.memory_space<vmem>>, vector<1x32xf32>
    %18 = vector.broadcast %17 : vector<1x32xf32> to vector<16x32xf32>
    %19 = arith.mulf %16, %18 : vector<16x32xf32>
    %c0_7 = arith.constant 0 : index
    %c0_8 = arith.constant 0 : index
    %20 = vector.load %arg3[%c0_7, %c0_8] : memref<1x32xf32, #tpu.memory_space<vmem>>, vector<1x32xf32>
    %21 = vector.broadcast %20 : vector<1x32xf32> to vector<16x32xf32>
    %22 = arith.addf %19, %21 : vector<16x32xf32>
    %23 = arith.truncf %22 : vector<16x32xf32> to vector<16x32xbf16>
    %c0_9 = arith.constant 0 : index
    %c0_10 = arith.constant 0 : index
    %24 = vector.load %arg4[%c0_9, %c0_10] : memref<32x1536xbf16, #tpu.memory_space<vmem>>, vector<32x1536xbf16>
    %cst_11 = arith.constant dense<0.000000e+00> : vector<16x1536xf32>
    %25 = tpu.matmul %23, %24, %cst_11 {dimension_numbers = #tpu.dot_dimension_numbers<[1], [0], [0], [1], [0, 0, 1, 1], [], []>} : vector<16x32xbf16>, vector<32x1536xbf16>, vector<16x1536xf32> -> vector<16x1536xf32>
    %c0_12 = arith.constant 0 : index
    %c0_13 = arith.constant 0 : index
    %26 = vector.load %arg5[%c0_12, %c0_13] : memref<16x1536xf32, #tpu.memory_space<vmem>>, vector<16x1536xf32>
    tpu.vector_store %arg5[%c0_12, %c0_13], %25 {strides = array<i32>} : memref<16x1536xf32, #tpu.memory_space<vmem>>, vector<16x1536xf32>,
    return
  }
  func.func @transform_0(%arg0: i32) -> (i32, i32) {
    %c0_i32 = arith.constant 0 : i32
    %c0_i32_0 = arith.constant 0 : i32
    return %arg0, %c0_i32 : i32, i32
  }
  func.func @transform_1(%arg0: i32) -> (i32, i32) {
    %c0_i32 = arith.constant 0 : i32
    %c0_i32_0 = arith.constant 0 : i32
    %c0_i32_1 = arith.constant 0 : i32
    return %c0_i32, %c0_i32_0 : i32, i32
  }
  func.func @transform_2(%arg0: i32) -> (i32, i32) {
    %c0_i32 = arith.constant 0 : i32
    %c0_i32_0 = arith.constant 0 : i32
    %c0_i32_1 = arith.constant 0 : i32
    return %c0_i32, %c0_i32_0 : i32, i32
  }
  func.func @transform_3(%arg0: i32) -> (i32, i32) {
    %c0_i32 = arith.constant 0 : i32
    %c0_i32_0 = arith.constant 0 : i32
    %c0_i32_1 = arith.constant 0 : i32
    return %c0_i32, %c0_i32_0 : i32, i32
  }
  func.func @transform_4(%arg0: i32) -> (i32, i32) {
    %c0_i32 = arith.constant 0 : i32
    %c0_i32_0 = arith.constant 0 : i32
    return %arg0, %c0_i32 : i32, i32
  }
}

</mosaic_0001>

<llo_original>
// kernel: tpu_custom_call.1
$region0: #{tpu_custom_call.1}
  #allocation0 [shape = 'u32[]', space=smem, size = 0x4, offset = 0x4, fixed_abs, tag = 'smem constant byte address 0x4 - core index']
  #allocation1 [shape = 'u32[144,128]{1,0:T(1,128)}', space=vmem, size = 0x12000, scoped, tag = 'internal scratch']
  %s0 = inlined_call_operand.hbm [shape: f32[16,32], index: 0, kind: input, shape index: {}]
  %s1 = inlined_call_operand.vmem [shape: f32[1,32], index: 1, kind: input, shape index: {}]
  %s2 = inlined_call_operand.vmem [shape: f32[1,32], index: 2, kind: input, shape index: {}]
  %s3 = inlined_call_operand.hbm [shape: bf16[32,1536], index: 3, kind: input, shape index: {}]
  %s4 = inlined_call_operand.hbm [shape: f32[16,1536], index: 4, kind: output, shape index: {}]
  %s5 = sld [smem:[#allocation0]]
  $region34: #{tpu_custom_call.1} parent=0
    _
  %s7 = ssub.s32 1, %s5
  %s8 = scalar_select 0, %s7, %s5
  $region1: #{tpu_custom_call.1} parent=0
    #allocation2 [shape = 'u8[8192]{0}', space=vmem, size = 0x2000, scoped, tag = 'input window, operand 0, single buffered']
    #allocation3 [shape = 's32[1]{0}', space=sflag, size = 0x4, scoped, tag = 'scoped memory for tpu_custom_call.1']
    #allocation4 [shape = 's32[1]{0}', space=sflag, size = 0x4, scoped, tag = 'scoped memory for tpu_custom_call.1']
    #allocation5 [shape = 'u8[98304]{0}', space=vmem, size = 0x18000, scoped, tag = 'input window, operand 3, single buffered']
    #allocation6 [shape = 's32[1]{0}', space=sflag, size = 0x4, scoped, tag = 'scoped memory for tpu_custom_call.1']
    #allocation7 [shape = 'u8[98304]{0}', space=vmem, size = 0x18000, scoped, tag = 'output window, operand 0, single buffered']
    %9 = vsyncpa [#allocation3], 0
    %10 = vsyncpa [#allocation6], 0
    %11 = vsyncpa [#allocation4], 0
    // Predicated region
    $region2: #{tpu_custom_call.1} parent=1 // pred_check
      _
    $region3: #{tpu_custom_call.1} parent=1 // pred_check_branch
      %13 = sbr.rel (0) target = $region5
    $region4: #{tpu_custom_call.1} parent=1 // pred_region
      %s15 = ssub.s32 256, 256
      %16 = vsyncadd [#allocation3], %s15
      %s17 = sshll.u32 [#allocation2], 4
      %s18 = int_to_ptr.vmem [resolvable:$true] %s17
      %23 = dma.hbm_to_vmem [thread:$0]  %s0, 256, %s18, [#allocation3], 128, 128, 8
    $region5: #{tpu_custom_call.1} parent=1 // pred_fallthru
      _
    // Predicated region
    $region6: #{tpu_custom_call.1} parent=1 // pred_check
      _
    $region7: #{tpu_custom_call.1} parent=1 // pred_check_branch
      %25 = sbr.rel (0) target = $region9
    $region8: #{tpu_custom_call.1} parent=1 // pred_region
      _
    $region9: #{tpu_custom_call.1} parent=1 // pred_fallthru
      _
    // Predicated region
    $region10: #{tpu_custom_call.1} parent=1 // pred_check
      _
    $region11: #{tpu_custom_call.1} parent=1 // pred_check_branch
      %27 = sbr.rel (0) target = $region13
    $region12: #{tpu_custom_call.1} parent=1 // pred_region
      _
    $region13: #{tpu_custom_call.1} parent=1 // pred_fallthru
      _
    // Predicated region
    $region14: #{tpu_custom_call.1} parent=1 // pred_check
      _
    $region15: #{tpu_custom_call.1} parent=1 // pred_check_branch
      %29 = sbr.rel (0) target = $region17
    $region16: #{tpu_custom_call.1} parent=1 // pred_region
      %s31 = ssub.s32 3072, 3072
      %32 = vsyncadd [#allocation6], %s31
      %s33 = sshll.u32 [#allocation5], 4
      %s34 = int_to_ptr.vmem [resolvable:$true] %s33
      %39 = dma.hbm_to_vmem [thread:$0]  %s3, 3072, %s34, [#allocation6], 768, 768, 48
    $region17: #{tpu_custom_call.1} parent=1 // pred_fallthru
      _
    // Predicated region
    $region18: #{tpu_custom_call.1} parent=1 // pred_check
      _
    $region19: #{tpu_custom_call.1} parent=1 // pred_check_branch
      %41 = sbr.rel (0) target = $region21
    $region20: #{tpu_custom_call.1} parent=1 // pred_region
      %42 = dma.done [#allocation3], 256
    $region21: #{tpu_custom_call.1} parent=1 // pred_fallthru
      _
    // Predicated region
    $region22: #{tpu_custom_call.1} parent=1 // pred_check
      _
    $region23: #{tpu_custom_call.1} parent=1 // pred_check_branch
      %44 = sbr.rel (0) target = $region25
    $region24: #{tpu_custom_call.1} parent=1 // pred_region
      %45 = dma.done [#allocation6], 3072
    $region25: #{tpu_custom_call.1} parent=1 // pred_fallthru
      _
    %v47 = vld [vmem:[#allocation2] sm:$0xff]
    %v48 = vld [vmem:[#allocation2 + $0x8] sm:$0xff]
    %vm49 = vcmask 261120
    %v50 = vsel %vm49, %v47, 0.0
    %51 = vadd.xlane.f32.xlu0 %v50
    %v52 = vpop.xlane.xlu0 %51
    %v53 = vsel %vm49, %v48, 0.0
    %54 = vadd.xlane.f32.xlu0 %v53
    %v55 = vpop.xlane.xlu0 %54
    %v56 = vrcp.pop 32.0
    %v57 = vmul.f32 %v52, %v56
    %v58 = vmul.f32 %v55, %v56
    %v59 = vsub.f32 %v47, %v57
    %v60 = vsub.f32 %v48, %v58
    %v61 = vmul.f32 %v59, %v59
    %v62 = vmul.f32 %v60, %v60
    %v63 = vsel %vm49, %v61, 0.0
    %64 = vadd.xlane.f32.xlu0 %v63
    %v65 = vpop.xlane.xlu0 %64
    %v66 = vsel %vm49, %v62, 0.0
    %67 = vadd.xlane.f32.xlu0 %v66
    %v68 = vpop.xlane.xlu0 %67
    %v69 = vmul.f32 %v65, %v56
    %v70 = vmul.f32 %v68, %v56
    %v71 = vadd.f32 %v69, 1e-05
    %v72 = vadd.f32 %v70, 1e-05
    %v73 = vrsqrt.pop %v71
    %v74 = vrsqrt.pop %v72
    %v75 = vmul.f32 %v59, %v73
    %v76 = vmul.f32 %v60, %v74
    %v77 = vld [vmem:[%s1] sm:$0x1]
    %v79 = vlaneseq
    %v80 = vshrl.u32 %v79, 7
    %v81 = vsub.s32 0, %v80
    %v82 = vrot.slane %v77, %v81
    %v84 = vmul.f32 %v75, %v82
    %v85 = vmul.f32 %v76, %v82
    %v86 = vld [vmem:[%s2] sm:$0x1]
    %v88 = vlaneseq
    %v89 = vshrl.u32 %v88, 7
    %v90 = vsub.s32 0, %v89
    %v91 = vrot.slane %v86, %v90
    %v93 = vadd.f32 %v84, %v91
    %v94 = vadd.f32 %v85, %v91
    %v95 = vpack.c.bf16 %v94, %v93
    %v96 = vld [vmem:[#allocation5] sm:$0xff]
    %v97 = vld [vmem:[#allocation5 + $0x8] sm:$0xff]
    %v98 = vld [vmem:[#allocation5 + $0x10] sm:$0xff]
    %v99 = vld [vmem:[#allocation5 + $0x18] sm:$0xff]
    %v100 = vld [vmem:[#allocation5 + $0x20] sm:$0xff]
    %v101 = vld [vmem:[#allocation5 + $0x28] sm:$0xff]
    %v102 = vld [vmem:[#allocation5 + $0x30] sm:$0xff]
    %v103 = vld [vmem:[#allocation5 + $0x38] sm:$0xff]
    %v104 = vld [vmem:[#allocation5 + $0x40] sm:$0xff]
    %v105 = vld [vmem:[#allocation5 + $0x48] sm:$0xff]
    %v106 = vld [vmem:[#allocation5 + $0x50] sm:$0xff]
    %v107 = vld [vmem:[#allocation5 + $0x58] sm:$0xff]
    %v108 = vld [vmem:[#allocation5 + $0x60] sm:$0xff]
    %v109 = vld [vmem:[#allocation5 + $0x68] sm:$0xff]
    %v110 = vld [vmem:[#allocation5 + $0x70] sm:$0xff]
    %v111 = vld [vmem:[#allocation5 + $0x78] sm:$0xff]
    %v112 = vld [vmem:[#allocation5 + $0x80] sm:$0xff]
    %v113 = vld [vmem:[#allocation5 + $0x88] sm:$0xff]
    %v114 = vld [vmem:[#allocation5 + $0x90] sm:$0xff]
    %v115 = vld [vmem:[#allocation5 + $0x98] sm:$0xff]
    %v116 = vld [vmem:[#allocation5 + $0xa0] sm:$0xff]
    %v117 = vld [vmem:[#allocation5 + $0xa8] sm:$0xff]
    %v118 = vld [vmem:[#allocation5 + $0xb0] sm:$0xff]
    %v119 = vld [vmem:[#allocation5 + $0xb8] sm:$0xff]
    %v144 = vunpack.c.l.b16 %v96
    %v145 = vunpack.c.h.b16 %v96
    %v146 = vunpack.c.l.b16 %v97
    %v147 = vunpack.c.h.b16 %v97
    %v148 = vunpack.c.l.b16 %v98
    %v149 = vunpack.c.h.b16 %v98
    %v150 = vunpack.c.l.b16 %v99
    %v151 = vunpack.c.h.b16 %v99
    %v152 = vunpack.c.l.b16 %v100
    %v153 = vunpack.c.h.b16 %v100
    %v154 = vunpack.c.l.b16 %v101
    %v155 = vunpack.c.h.b16 %v101
    %v156 = vunpack.c.l.b16 %v102
    %v157 = vunpack.c.h.b16 %v102
    %v158 = vunpack.c.l.b16 %v103
    %v159 = vunpack.c.h.b16 %v103
    %v160 = vunpack.c.l.b16 %v104
    %v161 = vunpack.c.h.b16 %v104
    %v162 = vunpack.c.l.b16 %v105
    %v163 = vunpack.c.h.b16 %v105
    %v164 = vunpack.c.l.b16 %v106
    %v165 = vunpack.c.h.b16 %v106
    %v166 = vunpack.c.l.b16 %v107
    %v167 = vunpack.c.h.b16 %v107
    %v168 = vunpack.c.l.b16 %v108
    %v169 = vunpack.c.h.b16 %v108
    %v170 = vunpack.c.l.b16 %v109
    %v171 = vunpack.c.h.b16 %v109
    %v172 = vunpack.c.l.b16 %v110
    %v173 = vunpack.c.h.b16 %v110
    %v174 = vunpack.c.l.b16 %v111
    %v175 = vunpack.c.h.b16 %v111
    %v176 = vunpack.c.l.b16 %v112
    %v177 = vunpack.c.h.b16 %v112
    %v178 = vunpack.c.l.b16 %v113
    %v179 = vunpack.c.h.b16 %v113
    %v180 = vunpack.c.l.b16 %v114
    %v181 = vunpack.c.h.b16 %v114
    %v182 = vunpack.c.l.b16 %v115
    %v183 = vunpack.c.h.b16 %v115
    %v184 = vunpack.c.l.b16 %v116
    %v185 = vunpack.c.h.b16 %v116
    %v186 = vunpack.c.l.b16 %v117
    %v187 = vunpack.c.h.b16 %v117
    %v188 = vunpack.c.l.b16 %v118
    %v189 = vunpack.c.h.b16 %v118
    %v190 = vunpack.c.l.b16 %v119
    %v191 = vunpack.c.h.b16 %v119
    %v192 = vpack.c.b16 %v156, %v144
    %v193 = vpack.c.b16 %v157, %v145
    %v194 = vpack.c.b16 %v158, %v146
    %v195 = vpack.c.b16 %v159, %v147
    %v196 = vpack.c.b16 %v160, %v148
    %v197 = vpack.c.b16 %v161, %v149
    %v198 = vpack.c.b16 %v162, %v150
    %v199 = vpack.c.b16 %v163, %v151
    %v200 = vpack.c.b16 %v164, %v152
    %v201 = vpack.c.b16 %v165, %v153
    %v202 = vpack.c.b16 %v166, %v154
    %v203 = vpack.c.b16 %v167, %v155
    %v204 = vpack.c.b16 %v180, %v168
    %v205 = vpack.c.b16 %v181, %v169
    %v206 = vpack.c.b16 %v182, %v170
    %v207 = vpack.c.b16 %v183, %v171
    %v208 = vpack.c.b16 %v184, %v172
    %v209 = vpack.c.b16 %v185, %v173
    %v210 = vpack.c.b16 %v186, %v174
    %v211 = vpack.c.b16 %v187, %v175
    %v212 = vpack.c.b16 %v188, %v176
    %v213 = vpack.c.b16 %v189, %v177
    %v214 = vpack.c.b16 %v190, %v178
    %v215 = vpack.c.b16 %v191, %v179
    %v241 = vsel %vm49, %v95, 0
    %243 = vmatprep.subr.bf16.mxu0 %v193
    %244 = vmatpush1.bf16.msra.mxu0 %v192
    %245 = vmatprep.subr.bf16.mxu0 %v205
    %246 = vmatpush1.bf16.msra.mxu0 %v204
    %247 = vmatprep.subr.bf16.mxu0 0
    %248 = vmatpush1.bf16.msra.mxu0 0
    %249 = vmatprep.subr.bf16.mxu0 0
    %250 = vmatpush1.bf16.msra.mxu0 0
    %251 = vmatprep.subr.bf16.mxu0 0
    %252 = vmatpush1.bf16.msra.mxu0 0
    %253 = vmatprep.subr.bf16.mxu0 0
    %254 = vmatpush1.bf16.msra.mxu0 0
    %255 = vmatprep.subr.bf16.mxu0 0
    %256 = vmatpush1.bf16.msra.mxu0 0
    %257 = vmatprep.subr.bf16.mxu0 0
    %258 = vmatpush1.bf16.msra.mxu0 0
    %259 = vmatprep.subr.bf16.mxu0 0
    %260 = vmatpush1.bf16.msra.mxu0 0
    %261 = vmatprep.subr.bf16.mxu0 0
    %262 = vmatpush1.bf16.msra.mxu0 0
    %263 = vmatprep.subr.bf16.mxu0 0
    %264 = vmatpush1.bf16.msra.mxu0 0
    %265 = vmatprep.subr.bf16.mxu0 0
    %266 = vmatpush1.bf16.msra.mxu0 0
    %267 = vmatprep.subr.bf16.mxu0 0
    %268 = vmatpush1.bf16.msra.mxu0 0
    %269 = vmatprep.subr.bf16.mxu0 0
    %270 = vmatpush1.bf16.msra.mxu0 0
    %271 = vmatprep.subr.bf16.mxu0 0
    %272 = vmatpush1.bf16.msra.mxu0 0
    %273 = vmatprep.subr.bf16.mxu0 0
    %274 = vmatpush1.bf16.msra.mxu0 0
    %275 = vmatprep.mubr.bf16.mxu0 0
    %276 = vmatmul.mubr.bf16.gmra.mrb[0].mxu0 %v241
    %v277 = vpop.f32.mrb[0].mxu0
    %v278 = vadd.f32 0.0, %v277
    %v279 = vpop.f32.mrb[0].mxu0
    %v280 = vadd.f32 0.0, %v279
    %v281 = vpop.f32.mrb[0].mxu0
    %v282 = vadd.f32 0.0, %v281
    %v283 = vpop.f32.mrb[0].mxu0
    %v284 = vadd.f32 0.0, %v283
    %285 = vdwg.mxu0
    %286 = vmatprep.subr.bf16.mxu0 %v195
    %287 = vmatpush1.bf16.msra.mxu0 %v194
    %288 = vmatprep.subr.bf16.mxu0 %v207
    %289 = vmatpush1.bf16.msra.mxu0 %v206
    %290 = vmatprep.subr.bf16.mxu0 0
    %291 = vmatpush1.bf16.msra.mxu0 0
    %292 = vmatprep.subr.bf16.mxu0 0
    %293 = vmatpush1.bf16.msra.mxu0 0
    %294 = vmatprep.subr.bf16.mxu0 0
    %295 = vmatpush1.bf16.msra.mxu0 0
    %296 = vmatprep.subr.bf16.mxu0 0
    %297 = vmatpush1.bf16.msra.mxu0 0
    %298 = vmatprep.subr.bf16.mxu0 0
    %299 = vmatpush1.bf16.msra.mxu0 0
    %300 = vmatprep.subr.bf16.mxu0 0
    %301 = vmatpush1.bf16.msra.mxu0 0
    %302 = vmatprep.subr.bf16.mxu0 0
    %303 = vmatpush1.bf16.msra.mxu0 0
    %304 = vmatprep.subr.bf16.mxu0 0
    %305 = vmatpush1.bf16.msra.mxu0 0
    %306 = vmatprep.subr.bf16.mxu0 0
    %307 = vmatpush1.bf16.msra.mxu0 0
    %308 = vmatprep.subr.bf16.mxu0 0
    %309 = vmatpush1.bf16.msra.mxu0 0
    %310 = vmatprep.subr.bf16.mxu0 0
    %311 = vmatpush1.bf16.msra.mxu0 0
    %312 = vmatprep.subr.bf16.mxu0 0
    %313 = vmatpush1.bf16.msra.mxu0 0
    %314 = vmatprep.subr.bf16.mxu0 0
    %315 = vmatpush1.bf16.msra.mxu0 0
    %316 = vmatprep.subr.bf16.mxu0 0
    %317 = vmatpush1.bf16.msra.mxu0 0
    %318 = vmatprep.mubr.bf16.mxu0 0
    %319 = vmatmul.mubr.bf16.gmra.mrb[0].mxu0 %v241
    %v320 = vpop.f32.mrb[0].mxu0
    %v321 = vadd.f32 0.0, %v320
    %v322 = vpop.f32.mrb[0].mxu0
    %v323 = vadd.f32 0.0, %v322
    %v324 = vpop.f32.mrb[0].mxu0
    %v325 = vadd.f32 0.0, %v324
    %v326 = vpop.f32.mrb[0].mxu0
    %v327 = vadd.f32 0.0, %v326
    %328 = vdwg.mxu0
    %329 = vmatprep.subr.bf16.mxu0 %v197
    %330 = vmatpush1.bf16.msra.mxu0 %v196
    %331 = vmatprep.subr.bf16.mxu0 %v209
    %332 = vmatpush1.bf16.msra.mxu0 %v208
    %333 = vmatprep.subr.bf16.mxu0 0
    %334 = vmatpush1.bf16.msra.mxu0 0
    %335 = vmatprep.subr.bf16.mxu0 0
    %336 = vmatpush1.bf16.msra.mxu0 0
    %337 = vmatprep.subr.bf16.mxu0 0
    %338 = vmatpush1.bf16.msra.mxu0 0
    %339 = vmatprep.subr.bf16.mxu0 0
    %340 = vmatpush1.bf16.msra.mxu0 0
    %341 = vmatprep.subr.bf16.mxu0 0
    %342 = vmatpush1.bf16.msra.mxu0 0
    %343 = vmatprep.subr.bf16.mxu0 0
    %344 = vmatpush1.bf16.msra.mxu0 0
    %345 = vmatprep.subr.bf16.mxu0 0
    %346 = vmatpush1.bf16.msra.mxu0 0
    %347 = vmatprep.subr.bf16.mxu0 0
    %348 = vmatpush1.bf16.msra.mxu0 0
    %349 = vmatprep.subr.bf16.mxu0 0
    %350 = vmatpush1.bf16.msra.mxu0 0
    %351 = vmatprep.subr.bf16.mxu0 0
    %352 = vmatpush1.bf16.msra.mxu0 0
    %353 = vmatprep.subr.bf16.mxu0 0
    %354 = vmatpush1.bf16.msra.mxu0 0
    %355 = vmatprep.subr.bf16.mxu0 0
    %356 = vmatpush1.bf16.msra.mxu0 0
    %357 = vmatprep.subr.bf16.mxu0 0
    %358 = vmatpush1.bf16.msra.mxu0 0
    %359 = vmatprep.subr.bf16.mxu0 0
    %360 = vmatpush1.bf16.msra.mxu0 0
    %361 = vmatprep.mubr.bf16.mxu0 0
    %362 = vmatmul.mubr.bf16.gmra.mrb[0].mxu0 %v241
    %v363 = vpop.f32.mrb[0].mxu0
    %v364 = vadd.f32 0.0, %v363
    %v365 = vpop.f32.mrb[0].mxu0
    %v366 = vadd.f32 0.0, %v365
    %v367 = vpop.f32.mrb[0].mxu0
    %v368 = vadd.f32 0.0, %v367
    %v369 = vpop.f32.mrb[0].mxu0
    %v370 = vadd.f32 0.0, %v369
    %371 = vdwg.mxu0
    %372 = vmatprep.subr.bf16.mxu0 %v199
    %373 = vmatpush1.bf16.msra.mxu0 %v198
    %374 = vmatprep.subr.bf16.mxu0 %v211
    %375 = vmatpush1.bf16.msra.mxu0 %v210
    %376 = vmatprep.subr.bf16.mxu0 0
    %377 = vmatpush1.bf16.msra.mxu0 0
    %378 = vmatprep.subr.bf16.mxu0 0
    %379 = vmatpush1.bf16.msra.mxu0 0
    %380 = vmatprep.subr.bf16.mxu0 0
    %381 = vmatpush1.bf16.msra.mxu0 0
    %382 = vmatprep.subr.bf16.mxu0 0
    %383 = vmatpush1.bf16.msra.mxu0 0
    %384 = vmatprep.subr.bf16.mxu0 0
    %385 = vmatpush1.bf16.msra.mxu0 0
    %386 = vmatprep.subr.bf16.mxu0 0
    %387 = vmatpush1.bf16.msra.mxu0 0
    %388 = vmatprep.subr.bf16.mxu0 0
    %389 = vmatpush1.bf16.msra.mxu0 0
    %390 = vmatprep.subr.bf16.mxu0 0
    %391 = vmatpush1.bf16.msra.mxu0 0
    %392 = vmatprep.subr.bf16.mxu0 0
    %393 = vmatpush1.bf16.msra.mxu0 0
    %394 = vmatprep.subr.bf16.mxu0 0
    %395 = vmatpush1.bf16.msra.mxu0 0
    %396 = vmatprep.subr.bf16.mxu0 0
    %397 = vmatpush1.bf16.msra.mxu0 0
    %398 = vmatprep.subr.bf16.mxu0 0
    %399 = vmatpush1.bf16.msra.mxu0 0
    %400 = vmatprep.subr.bf16.mxu0 0
    %401 = vmatpush1.bf16.msra.mxu0 0
    %402 = vmatprep.subr.bf16.mxu0 0
    %403 = vmatpush1.bf16.msra.mxu0 0
    %404 = vmatprep.mubr.bf16.mxu0 0
    %405 = vmatmul.mubr.bf16.gmra.mrb[0].mxu0 %v241
    %v406 = vpop.f32.mrb[0].mxu0
    %v407 = vadd.f32 0.0, %v406
    %v408 = vpop.f32.mrb[0].mxu0
    %v409 = vadd.f32 0.0, %v408
    %v410 = vpop.f32.mrb[0].mxu0
    %v411 = vadd.f32 0.0, %v410
    %v412 = vpop.f32.mrb[0].mxu0
    %v413 = vadd.f32 0.0, %v412
    %414 = vdwg.mxu0
    %415 = vmatprep.subr.bf16.mxu0 %v201
    %416 = vmatpush1.bf16.msra.mxu0 %v200
    %417 = vmatprep.subr.bf16.mxu0 %v213
    %418 = vmatpush1.bf16.msra.mxu0 %v212
    %419 = vmatprep.subr.bf16.mxu0 0
    %420 = vmatpush1.bf16.msra.mxu0 0
    %421 = vmatprep.subr.bf16.mxu0 0
    %422 = vmatpush1.bf16.msra.mxu0 0
    %423 = vmatprep.subr.bf16.mxu0 0
    %424 = vmatpush1.bf16.msra.mxu0 0
    %425 = vmatprep.subr.bf16.mxu0 0
    %426 = vmatpush1.bf16.msra.mxu0 0
    %427 = vmatprep.subr.bf16.mxu0 0
    %428 = vmatpush1.bf16.msra.mxu0 0
    %429 = vmatprep.subr.bf16.mxu0 0
    %430 = vmatpush1.bf16.msra.mxu0 0
    %431 = vmatprep.subr.bf16.mxu0 0
    %432 = vmatpush1.bf16.msra.mxu0 0
    %433 = vmatprep.subr.bf16.mxu0 0
    %434 = vmatpush1.bf16.msra.mxu0 0
    %435 = vmatprep.subr.bf16.mxu0 0
    %436 = vmatpush1.bf16.msra.mxu0 0
    %437 = vmatprep.subr.bf16.mxu0 0
    %438 = vmatpush1.bf16.msra.mxu0 0
    %439 = vmatprep.subr.bf16.mxu0 0
    %440 = vmatpush1.bf16.msra.mxu0 0
    %441 = vmatprep.subr.bf16.mxu0 0
    %442 = vmatpush1.bf16.msra.mxu0 0
    %443 = vmatprep.subr.bf16.mxu0 0
    %444 = vmatpush1.bf16.msra.mxu0 0
    %445 = vmatprep.subr.bf16.mxu0 0
    %446 = vmatpush1.bf16.msra.mxu0 0
    %447 = vmatprep.mubr.bf16.mxu0 0
    %448 = vmatmul.mubr.bf16.gmra.mrb[0].mxu0 %v241
    %v449 = vpop.f32.mrb[0].mxu0
    %v450 = vadd.f32 0.0, %v449
    %v451 = vpop.f32.mrb[0].mxu0
    %v452 = vadd.f32 0.0, %v451
    %v453 = vpop.f32.mrb[0].mxu0
    %v454 = vadd.f32 0.0, %v453
    %v455 = vpop.f32.mrb[0].mxu0
    %v456 = vadd.f32 0.0, %v455
    %457 = vdwg.mxu0
    %458 = vmatprep.subr.bf16.mxu0 %v203
    %459 = vmatpush1.bf16.msra.mxu0 %v202
    %460 = vmatprep.subr.bf16.mxu0 %v215
    %461 = vmatpush1.bf16.msra.mxu0 %v214
    %462 = vmatprep.subr.bf16.mxu0 0
    %463 = vmatpush1.bf16.msra.mxu0 0
    %464 = vmatprep.subr.bf16.mxu0 0
    %465 = vmatpush1.bf16.msra.mxu0 0
    %466 = vmatprep.subr.bf16.mxu0 0
    %467 = vmatpush1.bf16.msra.mxu0 0
    %468 = vmatprep.subr.bf16.mxu0 0
    %469 = vmatpush1.bf16.msra.mxu0 0
    %470 = vmatprep.subr.bf16.mxu0 0
    %471 = vmatpush1.bf16.msra.mxu0 0
    %472 = vmatprep.subr.bf16.mxu0 0
    %473 = vmatpush1.bf16.msra.mxu0 0
    %474 = vmatprep.subr.bf16.mxu0 0
    %475 = vmatpush1.bf16.msra.mxu0 0
    %476 = vmatprep.subr.bf16.mxu0 0
    %477 = vmatpush1.bf16.msra.mxu0 0
    %478 = vmatprep.subr.bf16.mxu0 0
    %479 = vmatpush1.bf16.msra.mxu0 0
    %480 = vmatprep.subr.bf16.mxu0 0
    %481 = vmatpush1.bf16.msra.mxu0 0
    %482 = vmatprep.subr.bf16.mxu0 0
    %483 = vmatpush1.bf16.msra.mxu0 0
    %484 = vmatprep.subr.bf16.mxu0 0
    %485 = vmatpush1.bf16.msra.mxu0 0
    %486 = vmatprep.subr.bf16.mxu0 0
    %487 = vmatpush1.bf16.msra.mxu0 0
    %488 = vmatprep.subr.bf16.mxu0 0
    %489 = vmatpush1.bf16.msra.mxu0 0
    %490 = vmatprep.mubr.bf16.mxu0 0
    %491 = vmatmul.mubr.bf16.gmra.mrb[0].mxu0 %v241
    %v492 = vpop.f32.mrb[0].mxu0
    %v493 = vadd.f32 0.0, %v492
    %v494 = vpop.f32.mrb[0].mxu0
    %v495 = vadd.f32 0.0, %v494
    %v496 = vpop.f32.mrb[0].mxu0
    %v497 = vadd.f32 0.0, %v496
    %v498 = vpop.f32.mrb[0].mxu0
    %v499 = vadd.f32 0.0, %v498
    %500 = vdwg.mxu0
    %501 = vst [vmem:[#allocation7] sm:$0xff] %v278
    %502 = vst [vmem:[#allocation7 + $0x8] sm:$0xff] %v280
    %503 = vst [vmem:[#allocation7 + $0x10] sm:$0xff] %v321
    %504 = vst [vmem:[#allocation7 + $0x18] sm:$0xff] %v323
    %505 = vst [vmem:[#allocation7 + $0x20] sm:$0xff] %v364
    %506 = vst [vmem:[#allocation7 + $0x28] sm:$0xff] %v366
    %507 = vst [vmem:[#allocation7 + $0x30] sm:$0xff] %v407
    %508 = vst [vmem:[#allocation7 + $0x38] sm:$0xff] %v409
    %509 = vst [vmem:[#allocation7 + $0x40] sm:$0xff] %v450
    %510 = vst [vmem:[#allocation7 + $0x48] sm:$0xff] %v452
    %511 = vst [vmem:[#allocation7 + $0x50] sm:$0xff] %v493
    %512 = vst [vmem:[#allocation7 + $0x58] sm:$0xff] %v495
    %513 = vst [vmem:[#allocation7 + $0x60] sm:$0xff] %v282
    %514 = vst [vmem:[#allocation7 + $0x68] sm:$0xff] %v284
    %515 = vst [vmem:[#allocation7 + $0x70] sm:$0xff] %v325
    %516 = vst [vmem:[#allocation7 + $0x78] sm:$0xff] %v327
    %517 = vst [vmem:[#allocation7 + $0x80] sm:$0xff] %v368
    %518 = vst [vmem:[#allocation7 + $0x88] sm:$0xff] %v370
    %519 = vst [vmem:[#allocation7 + $0x90] sm:$0xff] %v411
    %520 = vst [vmem:[#allocation7 + $0x98] sm:$0xff] %v413
    %521 = vst [vmem:[#allocation7 + $0xa0] sm:$0xff] %v454
    %522 = vst [vmem:[#allocation7 + $0xa8] sm:$0xff] %v456
    %523 = vst [vmem:[#allocation7 + $0xb0] sm:$0xff] %v497
    %524 = vst [vmem:[#allocation7 + $0xb8] sm:$0xff] %v499
    // Predicated region
    $region26: #{tpu_custom_call.1} parent=1 // pred_check
      _
    $region27: #{tpu_custom_call.1} parent=1 // pred_check_branch
      %526 = sbr.rel (0) target = $region29
    $region28: #{tpu_custom_call.1} parent=1 // pred_region
      %s528 = ssub.s32 3072, 3072
      %529 = vsyncadd [#allocation4], %s528
      %s530 = sshll.u32 [#allocation7], 4
      %s531 = int_to_ptr.vmem [resolvable:$true] %s530
      %536 = dma.vmem_to_hbm [thread:$0]  %s531, 3072, %s4, [#allocation4], 1536, 1536, 96
    $region29: #{tpu_custom_call.1} parent=1 // pred_fallthru
      _
    // Predicated region
    $region30: #{tpu_custom_call.1} parent=1 // pred_check
      _
    $region31: #{tpu_custom_call.1} parent=1 // pred_check_branch
      %538 = sbr.rel (0) target = $region33
    $region32: #{tpu_custom_call.1} parent=1 // pred_region
      %539 = dma.done [#allocation4], 3072
    $region33: #{tpu_custom_call.1} parent=1 // pred_fallthru
      _
    %540 = vsyncpa [#allocation3], 1
    %541 = vsyncpa [#allocation6], 1
    %542 = vsyncpa [#allocation4], 1

</llo_original>
